<compile_context>
chip_gen: v6e
topology: v6e:2x2x1
jax: 0.10.0
libtpu: 0.0.40
codegen_flags: <defaults>
</compile_context>

<pallas_src>
import jax
import jax.numpy as jnp
from jax.experimental import pallas as pl
from jax.experimental.pallas import tpu as pltpu


def _round_up(x, m):
    return ((x + m - 1) // m) * m


def _vmem_capacity_bytes():
    cap = None
    try:
        cap = getattr(pltpu.get_tpu_info(), "vmem_capacity_bytes", None)
    except Exception:
        cap = None
    # Conservative fallback: v7x has 64 MiB per TensorCore (smallest of any gen).
    return int(cap) if cap else 64 * 1024 * 1024


def alds_loss(S, S_prime, Z, Z_prime, X, X_prime, Q, lamb, *,
              tm=None, target_step_read_bytes=16 * 1024 * 1024):
    """ALDS loss forward.  All seven matrices must share the same (M, N) shape."""
    inputs = (S, S_prime, Z, Z_prime, X, X_prime, Q)
    M, N = S.shape
    for a in inputs:
        assert a.shape == (M, N), "all ALDS inputs must share one (M, N) shape"

    sum_itemsize = sum(jnp.dtype(a.dtype).itemsize for a in inputs)
    vmem_cap = _vmem_capacity_bytes()

    # Per-row VMEM cost: 7 double-buffered native-dtype input tiles plus a budget
    # of ~8 f32 tile-rows for the elementwise temporaries Mosaic may materialize
    # (casts, diffs, squares, iota / mask).
    bytes_per_row = 2 * N * sum_itemsize + 8 * N * 4

    tile_budget = int(0.60 * vmem_cap)
    tm_vmem_cap = max(8, (tile_budget // bytes_per_row) // 8 * 8)
    tm_target = max(8, (target_step_read_bytes // (N * sum_itemsize)) // 8 * 8)

    if tm is None:
        tm_eff = min(tm_target, tm_vmem_cap)
    else:
        tm_eff = min(max(8, (int(tm) // 8) * 8), tm_vmem_cap)
    tm_eff = max(8, min(tm_eff, _round_up(M, 8)))

    total_tiles = (M + tm_eff - 1) // tm_eff
    num_par = 2 if total_tiles >= 2 else 1          # 2-TC split (v7x / megacore)
    tiles_per_core = (total_tiles + num_par - 1) // num_par
    padded_tiles = num_par * tiles_per_core

    needs_mask = (M % tm_eff != 0) or (padded_tiles != total_tiles)
    g = tm_eff // 8

    def in_map(c, j):
        t = c * tiles_per_core + j
        if padded_tiles != total_tiles:
            # Clamp the second core's redundant last step onto a valid tile;
            # its contribution is zeroed by the (unclamped) row mask below.
            t = jnp.minimum(t, total_tiles - 1)
        return (t, 0)

    row_spec = pl.BlockSpec((tm_eff, N), in_map)
    out_spec = pl.BlockSpec((None, 8, N), lambda c, j: (c, 0, 0))
    out_sh = jax.ShapeDtypeStruct((num_par, 8, N), jnp.float32)

    def kernel(s_ref, sp_ref, z_ref, zp_ref, x_ref, xp_ref, q_ref,
               recs_o, lossz_o, lossr_o, maxq_o):
        c = pl.program_id(0)
        j = pl.program_id(1)

        @pl.when(j == 0)
        def _init():
            recs_o[...] = jnp.zeros_like(recs_o)
            lossz_o[...] = jnp.zeros_like(lossz_o)
            lossr_o[...] = jnp.zeros_like(lossr_o)
            # Zero init is exact for norm_inf because |Q| >= 0.
            maxq_o[...] = jnp.zeros_like(maxq_o)

        valid = None
        if needs_mask:
            t_log = c * tiles_per_core + j           # UNclamped logical tile
            rows = t_log * tm_eff + jax.lax.broadcasted_iota(
                jnp.int32, (tm_eff, N), 0)
            valid = rows < M

        def sq_fold(a_ref, b_ref):
            # In-kernel f32 cast right after the native-dtype tile load.
            d = a_ref[...].astype(jnp.float32) - b_ref[...].astype(jnp.float32)
            d = d * d
            if needs_mask:
                d = jnp.where(valid, d, 0.0)         # select: garbage/NaN-safe
            # Fold rows into an (8, N) vreg-aligned partial (pure VPU combine).
            return jnp.sum(d.reshape(g, 8, N), axis=0)

        # Stream-by-stream processing keeps live f32 temporaries small; the
        # output blocks are resident across the "arbitrary" axis (accumulators).
        recs_o[...] = recs_o[...] + sq_fold(s_ref, sp_ref)
        lossz_o[...] = lossz_o[...] + sq_fold(z_ref, zp_ref)
        lossr_o[...] = lossr_o[...] + sq_fold(x_ref, xp_ref)

        qa = jnp.abs(q_ref[...].astype(jnp.float32))
        if needs_mask:
            qa = jnp.where(valid, qa, 0.0)
        maxq_o[...] = jnp.maximum(maxq_o[...],
                                  jnp.max(qa.reshape(g, 8, N), axis=0))

    vmem_limit = bytes_per_row * tm_eff + 4 * (8 * N * 4) * 2 + (6 << 20)
    vmem_limit = int(min(max(vmem_limit, 16 << 20), int(0.8 * vmem_cap)))

    recs, lossz, lossr, maxq = pl.pallas_call(
        kernel,
        out_shape=(out_sh, out_sh, out_sh, out_sh),
        grid_spec=pltpu.PrefetchScalarGridSpec(
            num_scalar_prefetch=0,
            grid=(num_par, tiles_per_core),
            in_specs=[row_spec] * 7,
            out_specs=(out_spec, out_spec, out_spec, out_spec),
        ),
        compiler_params=pltpu.CompilerParams(
            dimension_semantics=("parallel", "arbitrary"),
            vmem_limit_bytes=vmem_limit),
    )(*inputs)

    # Tiny cross-core / cross-vreg reductions + scalar glue in plain XLA.
    loss_recS = jnp.sum(recs)
    loss_Z = jnp.sum(lossz)
    loss_r = jnp.sum(lossr)
    norm_q = jnp.sum(jnp.max(maxq, axis=(0, 1)))   # max over cores/sublanes, then sum
    loss_S = loss_recS + lamb * norm_q

    return {
        "loss_S": loss_S,
        "loss_recS": loss_recS,
        "norm_q": norm_q,
        "loss_Z": loss_Z,
        "loss_r": loss_r,
    }


def _reference(S, S_prime, Z, Z_prime, X, X_prime, Q, lamb):
    S, S_prime, Z, Z_prime, X, X_prime, Q = (
        a.astype(jnp.float32) for a in (S, S_prime, Z, Z_prime, X, X_prime, Q))
    loss_recS = jnp.sum((S - S_prime) ** 2)
    norm_q = jnp.sum(jnp.max(jnp.abs(Q), axis=0))
    return {
        "loss_S": loss_recS + lamb * norm_q,
        "loss_recS": loss_recS,
        "norm_q": norm_q,
        "loss_Z": jnp.sum((Z - Z_prime) ** 2),
        "loss_r": jnp.sum((X - X_prime) ** 2),
    }


def _run_case(key, M, N, lamb, dtype=jnp.float32, tm=None):
    keys = jax.random.split(key, 7)
    mats = [jax.random.normal(k, (M, N), dtype=jnp.float32).astype(dtype)
            for k in keys]
    out = alds_loss(*mats, lamb, tm=tm)
    out = jax.tree_util.tree_map(jax.block_until_ready, out)
    ref = _reference(*mats, lamb)
    for k in out:
        assert jnp.allclose(out[k], ref[k], rtol=1e-5, atol=1e-3), (
            k, out[k], ref[k])


if __name__ == "__main__":
    key = jax.random.PRNGKey(0)
    k1, k2, k3, k4 = jax.random.split(key, 4)
    lamb = jnp.float32(0.1)

    # Ragged row count, single tile (exercises in-kernel tail masking).
    _run_case(k1, M=20, N=128, lamb=lamb)
    # Multi-tile + 2-core split with an ODD tile count (exercises the clamped
    # duplicate tile and the cross-core partial combination).
    _run_case(k2, M=400, N=128, lamb=lamb, tm=64)
    # Larger case with default (byte-target) tile sizing.
    _run_case(k3, M=1024, N=256, lamb=lamb)
    # bf16 inputs: exercises the in-kernel f32 cast path (half HBM reads).
    _run_case(k4, M=160, N=128, lamb=lamb, dtype=jnp.bfloat16, tm=64)

    print("KERNEL_OK")
</pallas_src>

<mosaic_0001>
module attributes {stable_mosaic.version = 11 : i64} {
  func.func @kernel(%arg0: i32, %arg1: i32, %arg2: memref<24x128xf32, #tpu.memory_space<vmem>>, %arg3: memref<24x128xf32, #tpu.memory_space<vmem>>, %arg4: memref<24x128xf32, #tpu.memory_space<vmem>>, %arg5: memref<24x128xf32, #tpu.memory_space<vmem>>, %arg6: memref<24x128xf32, #tpu.memory_space<vmem>>, %arg7: memref<24x128xf32, #tpu.memory_space<vmem>>, %arg8: memref<24x128xf32, #tpu.memory_space<vmem>>, %arg9: memref<1x8x128xf32, #tpu.memory_space<vmem>>, %arg10: memref<1x8x128xf32, #tpu.memory_space<vmem>>, %arg11: memref<1x8x128xf32, #tpu.memory_space<vmem>>, %arg12: memref<1x8x128xf32, #tpu.memory_space<vmem>>) attributes {dimension_semantics = [#tpu.dimension_semantics<parallel>, #tpu.dimension_semantics<arbitrary>], iteration_bounds = array<i64: 1, 1>, scalar_prefetch = 0 : i64, scratch_operands = 0 : i64, tpu.core_type = #tpu.core_type<tc>, window_params = [{transform_indices = @transform_0, window_bounds = array<i64: 24, 128>}, {transform_indices = @transform_1, window_bounds = array<i64: 24, 128>}, {transform_indices = @transform_2, window_bounds = array<i64: 24, 128>}, {transform_indices = @transform_3, window_bounds = array<i64: 24, 128>}, {transform_indices = @transform_4, window_bounds = array<i64: 24, 128>}, {transform_indices = @transform_5, window_bounds = array<i64: 24, 128>}, {transform_indices = @transform_6, window_bounds = array<i64: 24, 128>}, {transform_indices = @transform_7, window_bounds = array<i64: 1, 8, 128>}, {transform_indices = @transform_8, window_bounds = array<i64: 1, 8, 128>}, {transform_indices = @transform_9, window_bounds = array<i64: 1, 8, 128>}, {transform_indices = @transform_10, window_bounds = array<i64: 1, 8, 128>}]} {
    %c0_i32 = arith.constant 0 : i32
    %0 = arith.cmpi eq, %arg1, %c0_i32 : i32
    %1 = arith.extui %0 : i1 to i32
    %c0_i32_0 = arith.constant 0 : i32
    %2 = arith.cmpi ne, %1, %c0_i32_0 : i32
    scf.if %2 {
      %cst_45 = arith.constant 0.000000e+00 : f32
      %65 = vector.broadcast %cst_45 : f32 to vector<8x128xf32>
      %c0_46 = arith.constant 0 : index
      %c0_47 = arith.constant 0 : index
      %c0_48 = arith.constant 0 : index
      %66 = vector.load %arg9[%c0_46, %c0_47, %c0_48] : memref<1x8x128xf32, #tpu.memory_space<vmem>>, vector<1x8x128xf32>
      %67 = vector.shape_cast %66 : vector<1x8x128xf32> to vector<8x128xf32>
      %68 = vector.shape_cast %65 : vector<8x128xf32> to vector<1x8x128xf32>
      tpu.vector_store %arg9[%c0_46, %c0_47, %c0_48], %68 {strides = array<i32>} : memref<1x8x128xf32, #tpu.memory_space<vmem>>, vector<1x8x128xf32>,
      %cst_49 = arith.constant 0.000000e+00 : f32
      %69 = vector.broadcast %cst_49 : f32 to vector<8x128xf32>
      %c0_50 = arith.constant 0 : index
      %c0_51 = arith.constant 0 : index
      %c0_52 = arith.constant 0 : index
      %70 = vector.load %arg10[%c0_50, %c0_51, %c0_52] : memref<1x8x128xf32, #tpu.memory_space<vmem>>, vector<1x8x128xf32>
      %71 = vector.shape_cast %70 : vector<1x8x128xf32> to vector<8x128xf32>
      %72 = vector.shape_cast %69 : vector<8x128xf32> to vector<1x8x128xf32>
      tpu.vector_store %arg10[%c0_50, %c0_51, %c0_52], %72 {strides = array<i32>} : memref<1x8x128xf32, #tpu.memory_space<vmem>>, vector<1x8x128xf32>,
      %cst_53 = arith.constant 0.000000e+00 : f32
      %73 = vector.broadcast %cst_53 : f32 to vector<8x128xf32>
      %c0_54 = arith.constant 0 : index
      %c0_55 = arith.constant 0 : index
      %c0_56 = arith.constant 0 : index
      %74 = vector.load %arg11[%c0_54, %c0_55, %c0_56] : memref<1x8x128xf32, #tpu.memory_space<vmem>>, vector<1x8x128xf32>
      %75 = vector.shape_cast %74 : vector<1x8x128xf32> to vector<8x128xf32>
      %76 = vector.shape_cast %73 : vector<8x128xf32> to vector<1x8x128xf32>
      tpu.vector_store %arg11[%c0_54, %c0_55, %c0_56], %76 {strides = array<i32>} : memref<1x8x128xf32, #tpu.memory_space<vmem>>, vector<1x8x128xf32>,
      %cst_57 = arith.constant 0.000000e+00 : f32
      %77 = vector.broadcast %cst_57 : f32 to vector<8x128xf32>
      %c0_58 = arith.constant 0 : index
      %c0_59 = arith.constant 0 : index
      %c0_60 = arith.constant 0 : index
      %78 = vector.load %arg12[%c0_58, %c0_59, %c0_60] : memref<1x8x128xf32, #tpu.memory_space<vmem>>, vector<1x8x128xf32>
      %79 = vector.shape_cast %78 : vector<1x8x128xf32> to vector<8x128xf32>
      %80 = vector.shape_cast %77 : vector<8x128xf32> to vector<1x8x128xf32>
      tpu.vector_store %arg12[%c0_58, %c0_59, %c0_60], %80 {strides = array<i32>} : memref<1x8x128xf32, #tpu.memory_space<vmem>>, vector<1x8x128xf32>,
    } else {
    }
    %c1_i32 = arith.constant 1 : i32
    %3 = arith.muli %arg0, %c1_i32 : i32
    %4 = arith.addi %3, %arg1 : i32
    %c24_i32 = arith.constant 24 : i32
    %5 = arith.muli %4, %c24_i32 : i32
    %6 = tpu.iota {dimensions = array<i32: 0>} : vector<24x128xi32>
    %7 = vector.broadcast %5 : i32 to vector<24x128xi32>
    %8 = arith.addi %7, %6 : vector<24x128xi32>
    %c20_i32 = arith.constant 20 : i32
    %9 = vector.broadcast %c20_i32 : i32 to vector<24x128xi32>
    %10 = arith.cmpi slt, %8, %9 : vector<24x128xi32>
    %c0 = arith.constant 0 : index
    %c0_1 = arith.constant 0 : index
    %c0_2 = arith.constant 0 : index
    %11 = vector.load %arg9[%c0, %c0_1, %c0_2] : memref<1x8x128xf32, #tpu.memory_space<vmem>>, vector<1x8x128xf32>
    %12 = vector.shape_cast %11 : vector<1x8x128xf32> to vector<8x128xf32>
    %c0_3 = arith.constant 0 : index
    %c0_4 = arith.constant 0 : index
    %13 = vector.load %arg2[%c0_3, %c0_4] : memref<24x128xf32, #tpu.memory_space<vmem>>, vector<24x128xf32>
    %c0_5 = arith.constant 0 : index
    %c0_6 = arith.constant 0 : index
    %14 = vector.load %arg3[%c0_5, %c0_6] : memref<24x128xf32, #tpu.memory_space<vmem>>, vector<24x128xf32>
    %15 = arith.subf %13, %14 : vector<24x128xf32>
    %16 = arith.mulf %15, %15 : vector<24x128xf32>
    %cst = arith.constant 0.000000e+00 : f32
    %17 = vector.broadcast %cst : f32 to vector<24x128xf32>
    %18 = arith.select %10, %16, %17 : vector<24x128xi1>, vector<24x128xf32>
    %19 = vector.shape_cast %18 : vector<24x128xf32> to vector<3x8x128xf32>
    %cst_7 = arith.constant dense<0.000000e+00> : vector<8x128xf32>
    %20 = vector.multi_reduction <add>, %19, %cst_7 [0] : vector<3x8x128xf32> to vector<8x128xf32>
    %21 = arith.addf %12, %20 : vector<8x128xf32>
    %c0_8 = arith.constant 0 : index
    %c0_9 = arith.constant 0 : index
    %c0_10 = arith.constant 0 : index
    %22 = vector.load %arg9[%c0_8, %c0_9, %c0_10] : memref<1x8x128xf32, #tpu.memory_space<vmem>>, vector<1x8x128xf32>
    %23 = vector.shape_cast %22 : vector<1x8x128xf32> to vector<8x128xf32>
    %24 = vector.shape_cast %21 : vector<8x128xf32> to vector<1x8x128xf32>
    tpu.vector_store %arg9[%c0_8, %c0_9, %c0_10], %24 {strides = array<i32>} : memref<1x8x128xf32, #tpu.memory_space<vmem>>, vector<1x8x128xf32>,
    %c0_11 = arith.constant 0 : index
    %c0_12 = arith.constant 0 : index
    %c0_13 = arith.constant 0 : index
    %25 = vector.load %arg10[%c0_11, %c0_12, %c0_13] : memref<1x8x128xf32, #tpu.memory_space<vmem>>, vector<1x8x128xf32>
    %26 = vector.shape_cast %25 : vector<1x8x128xf32> to vector<8x128xf32>
    %c0_14 = arith.constant 0 : index
    %c0_15 = arith.constant 0 : index
    %27 = vector.load %arg4[%c0_14, %c0_15] : memref<24x128xf32, #tpu.memory_space<vmem>>, vector<24x128xf32>
    %c0_16 = arith.constant 0 : index
    %c0_17 = arith.constant 0 : index
    %28 = vector.load %arg5[%c0_16, %c0_17] : memref<24x128xf32, #tpu.memory_space<vmem>>, vector<24x128xf32>
    %29 = arith.subf %27, %28 : vector<24x128xf32>
    %30 = arith.mulf %29, %29 : vector<24x128xf32>
    %cst_18 = arith.constant 0.000000e+00 : f32
    %31 = vector.broadcast %cst_18 : f32 to vector<24x128xf32>
    %32 = arith.select %10, %30, %31 : vector<24x128xi1>, vector<24x128xf32>
    %33 = vector.shape_cast %32 : vector<24x128xf32> to vector<3x8x128xf32>
    %cst_19 = arith.constant dense<0.000000e+00> : vector<8x128xf32>
    %34 = vector.multi_reduction <add>, %33, %cst_19 [0] : vector<3x8x128xf32> to vector<8x128xf32>
    %35 = arith.addf %26, %34 : vector<8x128xf32>
    %c0_20 = arith.constant 0 : index
    %c0_21 = arith.constant 0 : index
    %c0_22 = arith.constant 0 : index
    %36 = vector.load %arg10[%c0_20, %c0_21, %c0_22] : memref<1x8x128xf32, #tpu.memory_space<vmem>>, vector<1x8x128xf32>
    %37 = vector.shape_cast %36 : vector<1x8x128xf32> to vector<8x128xf32>
    %38 = vector.shape_cast %35 : vector<8x128xf32> to vector<1x8x128xf32>
    tpu.vector_store %arg10[%c0_20, %c0_21, %c0_22], %38 {strides = array<i32>} : memref<1x8x128xf32, #tpu.memory_space<vmem>>, vector<1x8x128xf32>,
    %c0_23 = arith.constant 0 : index
    %c0_24 = arith.constant 0 : index
    %c0_25 = arith.constant 0 : index
    %39 = vector.load %arg11[%c0_23, %c0_24, %c0_25] : memref<1x8x128xf32, #tpu.memory_space<vmem>>, vector<1x8x128xf32>
    %40 = vector.shape_cast %39 : vector<1x8x128xf32> to vector<8x128xf32>
    %c0_26 = arith.constant 0 : index
    %c0_27 = arith.constant 0 : index
    %41 = vector.load %arg6[%c0_26, %c0_27] : memref<24x128xf32, #tpu.memory_space<vmem>>, vector<24x128xf32>
    %c0_28 = arith.constant 0 : index
    %c0_29 = arith.constant 0 : index
    %42 = vector.load %arg7[%c0_28, %c0_29] : memref<24x128xf32, #tpu.memory_space<vmem>>, vector<24x128xf32>
    %43 = arith.subf %41, %42 : vector<24x128xf32>
    %44 = arith.mulf %43, %43 : vector<24x128xf32>
    %cst_30 = arith.constant 0.000000e+00 : f32
    %45 = vector.broadcast %cst_30 : f32 to vector<24x128xf32>
    %46 = arith.select %10, %44, %45 : vector<24x128xi1>, vector<24x128xf32>
    %47 = vector.shape_cast %46 : vector<24x128xf32> to vector<3x8x128xf32>
    %cst_31 = arith.constant dense<0.000000e+00> : vector<8x128xf32>
    %48 = vector.multi_reduction <add>, %47, %cst_31 [0] : vector<3x8x128xf32> to vector<8x128xf32>
    %49 = arith.addf %40, %48 : vector<8x128xf32>
    %c0_32 = arith.constant 0 : index
    %c0_33 = arith.constant 0 : index
    %c0_34 = arith.constant 0 : index
    %50 = vector.load %arg11[%c0_32, %c0_33, %c0_34] : memref<1x8x128xf32, #tpu.memory_space<vmem>>, vector<1x8x128xf32>
    %51 = vector.shape_cast %50 : vector<1x8x128xf32> to vector<8x128xf32>
    %52 = vector.shape_cast %49 : vector<8x128xf32> to vector<1x8x128xf32>
    tpu.vector_store %arg11[%c0_32, %c0_33, %c0_34], %52 {strides = array<i32>} : memref<1x8x128xf32, #tpu.memory_space<vmem>>, vector<1x8x128xf32>,
    %c0_35 = arith.constant 0 : index
    %c0_36 = arith.constant 0 : index
    %53 = vector.load %arg8[%c0_35, %c0_36] : memref<24x128xf32, #tpu.memory_space<vmem>>, vector<24x128xf32>
    %54 = math.absf %53 : vector<24x128xf32>
    %cst_37 = arith.constant 0.000000e+00 : f32
    %55 = vector.broadcast %cst_37 : f32 to vector<24x128xf32>
    %56 = arith.select %10, %54, %55 : vector<24x128xi1>, vector<24x128xf32>
    %c0_38 = arith.constant 0 : index
    %c0_39 = arith.constant 0 : index
    %c0_40 = arith.constant 0 : index
    %57 = vector.load %arg12[%c0_38, %c0_39, %c0_40] : memref<1x8x128xf32, #tpu.memory_space<vmem>>, vector<1x8x128xf32>
    %58 = vector.shape_cast %57 : vector<1x8x128xf32> to vector<8x128xf32>
    %59 = vector.shape_cast %56 : vector<24x128xf32> to vector<3x8x128xf32>
    %cst_41 = arith.constant dense<0xFF800000> : vector<8x128xf32>
    %60 = vector.multi_reduction <maximumf>, %59, %cst_41 [0] : vector<3x8x128xf32> to vector<8x128xf32>
    %61 = arith.maximumf %58, %60 : vector<8x128xf32>
    %c0_42 = arith.constant 0 : index
    %c0_43 = arith.constant 0 : index
    %c0_44 = arith.constant 0 : index
    %62 = vector.load %arg12[%c0_42, %c0_43, %c0_44] : memref<1x8x128xf32, #tpu.memory_space<vmem>>, vector<1x8x128xf32>
    %63 = vector.shape_cast %62 : vector<1x8x128xf32> to vector<8x128xf32>
    %64 = vector.shape_cast %61 : vector<8x128xf32> to vector<1x8x128xf32>
    tpu.vector_store %arg12[%c0_42, %c0_43, %c0_44], %64 {strides = array<i32>} : memref<1x8x128xf32, #tpu.memory_space<vmem>>, vector<1x8x128xf32>,
    return
  }
  func.func @transform_0(%arg0: i32, %arg1: i32) -> (i32, i32) {
    %c1_i32 = arith.constant 1 : i32
    %0 = arith.muli %arg0, %c1_i32 : i32
    %1 = arith.addi %0, %arg1 : i32
    %c0_i32 = arith.constant 0 : i32
    %c0_i32_0 = arith.constant 0 : i32
    return %1, %c0_i32 : i32, i32
  }
  func.func @transform_1(%arg0: i32, %arg1: i32) -> (i32, i32) {
    %c1_i32 = arith.constant 1 : i32
    %0 = arith.muli %arg0, %c1_i32 : i32
    %1 = arith.addi %0, %arg1 : i32
    %c0_i32 = arith.constant 0 : i32
    %c0_i32_0 = arith.constant 0 : i32
    return %1, %c0_i32 : i32, i32
  }
  func.func @transform_2(%arg0: i32, %arg1: i32) -> (i32, i32) {
    %c1_i32 = arith.constant 1 : i32
    %0 = arith.muli %arg0, %c1_i32 : i32
    %1 = arith.addi %0, %arg1 : i32
    %c0_i32 = arith.constant 0 : i32
    %c0_i32_0 = arith.constant 0 : i32
    return %1, %c0_i32 : i32, i32
  }
  func.func @transform_3(%arg0: i32, %arg1: i32) -> (i32, i32) {
    %c1_i32 = arith.constant 1 : i32
    %0 = arith.muli %arg0, %c1_i32 : i32
    %1 = arith.addi %0, %arg1 : i32
    %c0_i32 = arith.constant 0 : i32
    %c0_i32_0 = arith.constant 0 : i32
    return %1, %c0_i32 : i32, i32
  }
  func.func @transform_4(%arg0: i32, %arg1: i32) -> (i32, i32) {
    %c1_i32 = arith.constant 1 : i32
    %0 = arith.muli %arg0, %c1_i32 : i32
    %1 = arith.addi %0, %arg1 : i32
    %c0_i32 = arith.constant 0 : i32
    %c0_i32_0 = arith.constant 0 : i32
    return %1, %c0_i32 : i32, i32
  }
  func.func @transform_5(%arg0: i32, %arg1: i32) -> (i32, i32) {
    %c1_i32 = arith.constant 1 : i32
    %0 = arith.muli %arg0, %c1_i32 : i32
    %1 = arith.addi %0, %arg1 : i32
    %c0_i32 = arith.constant 0 : i32
    %c0_i32_0 = arith.constant 0 : i32
    return %1, %c0_i32 : i32, i32
  }
  func.func @transform_6(%arg0: i32, %arg1: i32) -> (i32, i32) {
    %c1_i32 = arith.constant 1 : i32
    %0 = arith.muli %arg0, %c1_i32 : i32
    %1 = arith.addi %0, %arg1 : i32
    %c0_i32 = arith.constant 0 : i32
    %c0_i32_0 = arith.constant 0 : i32
    return %1, %c0_i32 : i32, i32
  }
  func.func @transform_7(%arg0: i32, %arg1: i32) -> (i32, i32, i32) {
    %c0_i32 = arith.constant 0 : i32
    %c0_i32_0 = arith.constant 0 : i32
    %c0_i32_1 = arith.constant 0 : i32
    return %arg0, %c0_i32, %c0_i32_0 : i32, i32, i32
  }
  func.func @transform_8(%arg0: i32, %arg1: i32) -> (i32, i32, i32) {
    %c0_i32 = arith.constant 0 : i32
    %c0_i32_0 = arith.constant 0 : i32
    %c0_i32_1 = arith.constant 0 : i32
    return %arg0, %c0_i32, %c0_i32_0 : i32, i32, i32
  }
  func.func @transform_9(%arg0: i32, %arg1: i32) -> (i32, i32, i32) {
    %c0_i32 = arith.constant 0 : i32
    %c0_i32_0 = arith.constant 0 : i32
    %c0_i32_1 = arith.constant 0 : i32
    return %arg0, %c0_i32, %c0_i32_0 : i32, i32, i32
  }
  func.func @transform_10(%arg0: i32, %arg1: i32) -> (i32, i32, i32) {
    %c0_i32 = arith.constant 0 : i32
    %c0_i32_0 = arith.constant 0 : i32
    %c0_i32_1 = arith.constant 0 : i32
    return %arg0, %c0_i32, %c0_i32_0 : i32, i32, i32
  }
}

</mosaic_0001>

<llo_original>
// kernel: tpu_custom_call.1
$region0: #{tpu_custom_call.1}
  #allocation0 [shape = 'u32[]', space=smem, size = 0x4, offset = 0x4, fixed_abs, tag = 'smem constant byte address 0x4 - core index']
  #allocation1 [shape = 'u32[144,128]{1,0:T(1,128)}', space=vmem, size = 0x12000, scoped, tag = 'internal scratch']
  %s0 = inlined_call_operand.hbm [shape: f32[20,128], index: 0, kind: input, shape index: {}]
  %s1 = inlined_call_operand.hbm [shape: f32[20,128], index: 1, kind: input, shape index: {}]
  %s2 = inlined_call_operand.hbm [shape: f32[20,128], index: 2, kind: input, shape index: {}]
  %s3 = inlined_call_operand.hbm [shape: f32[20,128], index: 3, kind: input, shape index: {}]
  %s4 = inlined_call_operand.hbm [shape: f32[20,128], index: 4, kind: input, shape index: {}]
  %s5 = inlined_call_operand.hbm [shape: f32[20,128], index: 5, kind: input, shape index: {}]
  %s6 = inlined_call_operand.hbm [shape: f32[20,128], index: 6, kind: input, shape index: {}]
  %s7 = inlined_call_operand.hbm [shape: f32[1,8,128], index: 7, kind: output, shape index: {0}]
  %s8 = inlined_call_operand.hbm [shape: f32[1,8,128], index: 8, kind: output, shape index: {1}]
  %s9 = inlined_call_operand.hbm [shape: f32[1,8,128], index: 9, kind: output, shape index: {2}]
  %s10 = inlined_call_operand.hbm [shape: f32[1,8,128], index: 10, kind: output, shape index: {3}]
  %11 = xla_tuple %s7, %s8, %s9, %s10
  %s12 = sld [smem:[#allocation0]]
  $region94: #{tpu_custom_call.1} parent=0
    _
  %s14 = ssub.s32 1, %s12
  %s15 = scalar_select 0, %s14, %s12
  $region1: #{tpu_custom_call.1} parent=0
    #allocation2 [shape = 'u8[12288]{0}', space=vmem, size = 0x3000, scoped, tag = 'input window, operand 0, single buffered']
    #allocation3 [shape = 's32[1]{0}', space=sflag, size = 0x4, scoped, tag = 'scoped memory for tpu_custom_call.1']
    #allocation4 [shape = 's32[1]{0}', space=sflag, size = 0x4, scoped, tag = 'scoped memory for tpu_custom_call.1']
    #allocation5 [shape = 'u8[12288]{0}', space=vmem, size = 0x3000, scoped, tag = 'input window, operand 1, single buffered']
    #allocation6 [shape = 's32[1]{0}', space=sflag, size = 0x4, scoped, tag = 'scoped memory for tpu_custom_call.1']
    #allocation7 [shape = 'u8[12288]{0}', space=vmem, size = 0x3000, scoped, tag = 'input window, operand 2, single buffered']
    #allocation8 [shape = 'u8[12288]{0}', space=vmem, size = 0x3000, scoped, tag = 'input window, operand 3, single buffered']
    #allocation9 [shape = 's32[1]{0}', space=sflag, size = 0x4, scoped, tag = 'scoped memory for tpu_custom_call.1']
    #allocation10 [shape = 'u8[12288]{0}', space=vmem, size = 0x3000, scoped, tag = 'input window, operand 4, single buffered']
    #allocation11 [shape = 'u8[12288]{0}', space=vmem, size = 0x3000, scoped, tag = 'input window, operand 5, single buffered']
    #allocation12 [shape = 's32[1]{0}', space=sflag, size = 0x4, scoped, tag = 'scoped memory for tpu_custom_call.1']
    #allocation13 [shape = 'u8[12288]{0}', space=vmem, size = 0x3000, scoped, tag = 'input window, operand 6, single buffered']
    #allocation14 [shape = 'u8[4096]{0}', space=vmem, size = 0x1000, scoped, tag = 'output window, operand 0, single buffered']
    #allocation15 [shape = 'u8[4096]{0}', space=vmem, size = 0x1000, scoped, tag = 'output window, operand 1, single buffered']
    #allocation16 [shape = 's32[1]{0}', space=sflag, size = 0x4, scoped, tag = 'scoped memory for tpu_custom_call.1']
    #allocation17 [shape = 'u8[4096]{0}', space=vmem, size = 0x1000, scoped, tag = 'output window, operand 2, single buffered']
    #allocation18 [shape = 'u8[4096]{0}', space=vmem, size = 0x1000, scoped, tag = 'output window, operand 3, single buffered']
    #allocation19 [shape = 's32[1]{0}', space=sflag, size = 0x4, scoped, tag = 'scoped memory for tpu_custom_call.1']
    %16 = vsyncpa [#allocation3], 0
    %17 = vsyncpa [#allocation6], 0
    %18 = vsyncpa [#allocation9], 0
    %19 = vsyncpa [#allocation12], 0
    %20 = vsyncpa [#allocation4], 0
    %21 = vsyncpa [#allocation16], 0
    %22 = vsyncpa [#allocation19], 0
    // Predicated region
    $region2: #{tpu_custom_call.1} parent=1 // pred_check
      _
    $region3: #{tpu_custom_call.1} parent=1 // pred_check_branch
      %24 = sbr.rel (0) target = $region5
    $region4: #{tpu_custom_call.1} parent=1 // pred_region
      %s25 = sadd.s32 0, 0
      %s26 = smul.u32 3, %s25
      %s28 = ssub.s32 384, 384
      %29 = vsyncadd [#allocation3], %s28
      %s30 = smul.addr %s26, 128
      %s31 = scalar_lea.hbm %s0, %s30
      %s32 = sshll.u32 [#allocation2], 4
      %s33 = int_to_ptr.vmem [resolvable:$true] %s32
      %38 = dma.hbm_to_vmem [thread:$0]  %s31, 384, %s33, [#allocation3], 128, 128, 8
    $region5: #{tpu_custom_call.1} parent=1 // pred_fallthru
      _
    // Predicated region
    $region6: #{tpu_custom_call.1} parent=1 // pred_check
      _
    $region7: #{tpu_custom_call.1} parent=1 // pred_check_branch
      %40 = sbr.rel (0) target = $region9
    $region8: #{tpu_custom_call.1} parent=1 // pred_region
      %s41 = sadd.s32 0, 0
      %s42 = smul.u32 3, %s41
      %s44 = ssub.s32 384, 384
      %45 = vsyncadd [#allocation6], %s44
      %s46 = smul.addr %s42, 128
      %s47 = scalar_lea.hbm %s1, %s46
      %s48 = sshll.u32 [#allocation5], 4
      %s49 = int_to_ptr.vmem [resolvable:$true] %s48
      %54 = dma.hbm_to_vmem [thread:$0]  %s47, 384, %s49, [#allocation6], 128, 128, 8
    $region9: #{tpu_custom_call.1} parent=1 // pred_fallthru
      _
    // Predicated region
    $region10: #{tpu_custom_call.1} parent=1 // pred_check
      _
    $region11: #{tpu_custom_call.1} parent=1 // pred_check_branch
      %56 = sbr.rel (0) target = $region13
    $region12: #{tpu_custom_call.1} parent=1 // pred_region
      %s57 = sadd.s32 0, 0
      %s58 = smul.u32 3, %s57
      %s60 = ssub.s32 384, 384
      %61 = vsyncadd [#allocation6], %s60
      %s62 = smul.addr %s58, 128
      %s63 = scalar_lea.hbm %s2, %s62
      %s64 = sshll.u32 [#allocation7], 4
      %s65 = int_to_ptr.vmem [resolvable:$true] %s64
      %70 = dma.hbm_to_vmem [thread:$0]  %s63, 384, %s65, [#allocation6], 128, 128, 8
    $region13: #{tpu_custom_call.1} parent=1 // pred_fallthru
      _
    // Predicated region
    $region14: #{tpu_custom_call.1} parent=1 // pred_check
      _
    $region15: #{tpu_custom_call.1} parent=1 // pred_check_branch
      %72 = sbr.rel (0) target = $region17
    $region16: #{tpu_custom_call.1} parent=1 // pred_region
      %s73 = sadd.s32 0, 0
      %s74 = smul.u32 3, %s73
      %s76 = ssub.s32 384, 384
      %77 = vsyncadd [#allocation9], %s76
      %s78 = smul.addr %s74, 128
      %s79 = scalar_lea.hbm %s3, %s78
      %s80 = sshll.u32 [#allocation8], 4
      %s81 = int_to_ptr.vmem [resolvable:$true] %s80
      %86 = dma.hbm_to_vmem [thread:$0]  %s79, 384, %s81, [#allocation9], 128, 128, 8
    $region17: #{tpu_custom_call.1} parent=1 // pred_fallthru
      _
    // Predicated region
    $region18: #{tpu_custom_call.1} parent=1 // pred_check
      _
    $region19: #{tpu_custom_call.1} parent=1 // pred_check_branch
      %88 = sbr.rel (0) target = $region21
    $region20: #{tpu_custom_call.1} parent=1 // pred_region
      %s89 = sadd.s32 0, 0
      %s90 = smul.u32 3, %s89
      %s92 = ssub.s32 384, 384
      %93 = vsyncadd [#allocation9], %s92
      %s94 = smul.addr %s90, 128
      %s95 = scalar_lea.hbm %s4, %s94
      %s96 = sshll.u32 [#allocation10], 4
      %s97 = int_to_ptr.vmem [resolvable:$true] %s96
      %102 = dma.hbm_to_vmem [thread:$0]  %s95, 384, %s97, [#allocation9], 128, 128, 8
    $region21: #{tpu_custom_call.1} parent=1 // pred_fallthru
      _
    // Predicated region
    $region22: #{tpu_custom_call.1} parent=1 // pred_check
      _
    $region23: #{tpu_custom_call.1} parent=1 // pred_check_branch
      %104 = sbr.rel (0) target = $region25
    $region24: #{tpu_custom_call.1} parent=1 // pred_region
      %s105 = sadd.s32 0, 0
      %s106 = smul.u32 3, %s105
      %s108 = ssub.s32 384, 384
      %109 = vsyncadd [#allocation12], %s108
      %s110 = smul.addr %s106, 128
      %s111 = scalar_lea.hbm %s5, %s110
      %s112 = sshll.u32 [#allocation11], 4
      %s113 = int_to_ptr.vmem [resolvable:$true] %s112
      %118 = dma.hbm_to_vmem [thread:$0]  %s111, 384, %s113, [#allocation12], 128, 128, 8
    $region25: #{tpu_custom_call.1} parent=1 // pred_fallthru
      _
    // Predicated region
    $region26: #{tpu_custom_call.1} parent=1 // pred_check
      _
    $region27: #{tpu_custom_call.1} parent=1 // pred_check_branch
      %120 = sbr.rel (0) target = $region29
    $region28: #{tpu_custom_call.1} parent=1 // pred_region
      %s121 = sadd.s32 0, 0
      %s122 = smul.u32 3, %s121
      %s124 = ssub.s32 384, 384
      %125 = vsyncadd [#allocation12], %s124
      %s126 = smul.addr %s122, 128
      %s127 = scalar_lea.hbm %s6, %s126
      %s128 = sshll.u32 [#allocation13], 4
      %s129 = int_to_ptr.vmem [resolvable:$true] %s128
      %134 = dma.hbm_to_vmem [thread:$0]  %s127, 384, %s129, [#allocation12], 128, 128, 8
    $region29: #{tpu_custom_call.1} parent=1 // pred_fallthru
      _
    // Predicated region
    $region30: #{tpu_custom_call.1} parent=1 // pred_check
      _
    $region31: #{tpu_custom_call.1} parent=1 // pred_check_branch
      %136 = sbr.rel (0) target = $region33
    $region32: #{tpu_custom_call.1} parent=1 // pred_region
      %137 = dma.done [#allocation3], 384
    $region33: #{tpu_custom_call.1} parent=1 // pred_fallthru
      _
    // Predicated region
    $region34: #{tpu_custom_call.1} parent=1 // pred_check
      _
    $region35: #{tpu_custom_call.1} parent=1 // pred_check_branch
      %139 = sbr.rel (0) target = $region37
    $region36: #{tpu_custom_call.1} parent=1 // pred_region
      %140 = dma.done [#allocation6], 384
    $region37: #{tpu_custom_call.1} parent=1 // pred_fallthru
      _
    // Predicated region
    $region38: #{tpu_custom_call.1} parent=1 // pred_check
      _
    $region39: #{tpu_custom_call.1} parent=1 // pred_check_branch
      %142 = sbr.rel (0) target = $region41
    $region40: #{tpu_custom_call.1} parent=1 // pred_region
      %143 = dma.done [#allocation6], 384
    $region41: #{tpu_custom_call.1} parent=1 // pred_fallthru
      _
    // Predicated region
    $region42: #{tpu_custom_call.1} parent=1 // pred_check
      _
    $region43: #{tpu_custom_call.1} parent=1 // pred_check_branch
      %145 = sbr.rel (0) target = $region45
    $region44: #{tpu_custom_call.1} parent=1 // pred_region
      %146 = dma.done [#allocation9], 384
    $region45: #{tpu_custom_call.1} parent=1 // pred_fallthru
      _
    // Predicated region
    $region46: #{tpu_custom_call.1} parent=1 // pred_check
      _
    $region47: #{tpu_custom_call.1} parent=1 // pred_check_branch
      %148 = sbr.rel (0) target = $region49
    $region48: #{tpu_custom_call.1} parent=1 // pred_region
      %149 = dma.done [#allocation9], 384
    $region49: #{tpu_custom_call.1} parent=1 // pred_fallthru
      _
    // Predicated region
    $region50: #{tpu_custom_call.1} parent=1 // pred_check
      _
    $region51: #{tpu_custom_call.1} parent=1 // pred_check_branch
      %151 = sbr.rel (0) target = $region53
    $region52: #{tpu_custom_call.1} parent=1 // pred_region
      %152 = dma.done [#allocation12], 384
    $region53: #{tpu_custom_call.1} parent=1 // pred_fallthru
      _
    // Predicated region
    $region54: #{tpu_custom_call.1} parent=1 // pred_check
      _
    $region55: #{tpu_custom_call.1} parent=1 // pred_check_branch
      %154 = sbr.rel (0) target = $region57
    $region56: #{tpu_custom_call.1} parent=1 // pred_region
      %155 = dma.done [#allocation12], 384
    $region57: #{tpu_custom_call.1} parent=1 // pred_fallthru
      _
    %s156 = sadd.s32 0, 0
    %s157 = smul.u32 3, %s156
    %s158 = sadd.s32 0, 0
    %s159 = smul.u32 3, %s158
    %s160 = sadd.s32 0, 0
    %s161 = smul.u32 3, %s160
    %s162 = sadd.s32 0, 0
    %s163 = smul.u32 3, %s162
    %s164 = sadd.s32 0, 0
    %s165 = smul.u32 3, %s164
    %s166 = sadd.s32 0, 0
    %s167 = smul.u32 3, %s166
    %s168 = sadd.s32 0, 0
    %s169 = smul.u32 3, %s168
    %p170 = scmp.eq.s32.totalorder 0, 0
    // Predicated region
    $region58: #{tpu_custom_call.1} parent=1 // pred_check
      %p171 = pneg %p170
    $region59: #{tpu_custom_call.1} parent=1 // pred_check_branch
      %173 = sbr.rel (%p171) target = $region61
    $region60: #{tpu_custom_call.1} parent=1 // pred_region
      %174 = vst [vmem:[#allocation14] sm:$0xff] 0.0
      %175 = vst [vmem:[#allocation15] sm:$0xff] 0.0
      %176 = vst [vmem:[#allocation17] sm:$0xff] 0.0
      %177 = vst [vmem:[#allocation18] sm:$0xff] 0.0
    $region61: #{tpu_custom_call.1} parent=1 // pred_fallthru
      _
    %s178 = sadd.s32 0, 0
    %s179 = smul.u32 %s178, 24
    %v180 = vlaneseq
    %v181 = vshrl.u32 %v180, 7
    %v182 = vadd.s32 %v181, 8
    %v183 = vadd.s32 %v181, 16
    %v184 = vstv %s179
    %v185 = vadd.s32 %v184, %v181
    %v186 = vadd.s32 %v184, %v182
    %v187 = vadd.s32 %v184, %v183
    %vm188 = vcmp.lt.s32.totalorder %v185, 20
    %vm189 = vcmp.lt.s32.totalorder %v186, 20
    %vm190 = vcmp.lt.s32.totalorder %v187, 20
    %v191 = vld [vmem:[#allocation14] sm:$0xff]
    %v192 = vld [vmem:[#allocation2] sm:$0xff]
    %v193 = vld [vmem:[#allocation2 + $0x8] sm:$0xff]
    %v194 = vld [vmem:[#allocation2 + $0x10] sm:$0xff]
    %v195 = vld [vmem:[#allocation5] sm:$0xff]
    %v196 = vld [vmem:[#allocation5 + $0x8] sm:$0xff]
    %v197 = vld [vmem:[#allocation5 + $0x10] sm:$0xff]
    %v198 = vsub.f32 %v192, %v195
    %v199 = vsub.f32 %v193, %v196
    %v200 = vsub.f32 %v194, %v197
    %v201 = vmul.f32 %v198, %v198
    %v202 = vmul.f32 %v199, %v199
    %v203 = vmul.f32 %v200, %v200
    %v204 = vsel %vm188, %v201, 0.0
    %v205 = vsel %vm189, %v202, 0.0
    %v206 = vsel %vm190, %v203, 0.0
    %v207 = vadd.f32 %v204, %v205
    %v208 = vadd.f32 %v207, %v206
    %v209 = vadd.f32 %v191, %v208
    %210 = vst [vmem:[#allocation14] sm:$0xff] %v209
    %v211 = vld [vmem:[#allocation15] sm:$0xff]
    %v212 = vld [vmem:[#allocation7] sm:$0xff]
    %v213 = vld [vmem:[#allocation7 + $0x8] sm:$0xff]
    %v214 = vld [vmem:[#allocation7 + $0x10] sm:$0xff]
    %v215 = vld [vmem:[#allocation8] sm:$0xff]
    %v216 = vld [vmem:[#allocation8 + $0x8] sm:$0xff]
    %v217 = vld [vmem:[#allocation8 + $0x10] sm:$0xff]
    %v218 = vsub.f32 %v212, %v215
    %v219 = vsub.f32 %v213, %v216
    %v220 = vsub.f32 %v214, %v217
    %v221 = vmul.f32 %v218, %v218
    %v222 = vmul.f32 %v219, %v219
    %v223 = vmul.f32 %v220, %v220
    %v224 = vsel %vm188, %v221, 0.0
    %v225 = vsel %vm189, %v222, 0.0
    %v226 = vsel %vm190, %v223, 0.0
    %v227 = vadd.f32 %v224, %v225
    %v228 = vadd.f32 %v227, %v226
    %v229 = vadd.f32 %v211, %v228
    %230 = vst [vmem:[#allocation15] sm:$0xff] %v229
    %v231 = vld [vmem:[#allocation17] sm:$0xff]
    %v232 = vld [vmem:[#allocation10] sm:$0xff]
    %v233 = vld [vmem:[#allocation10 + $0x8] sm:$0xff]
    %v234 = vld [vmem:[#allocation10 + $0x10] sm:$0xff]
    %v235 = vld [vmem:[#allocation11] sm:$0xff]
    %v236 = vld [vmem:[#allocation11 + $0x8] sm:$0xff]
    %v237 = vld [vmem:[#allocation11 + $0x10] sm:$0xff]
    %v238 = vsub.f32 %v232, %v235
    %v239 = vsub.f32 %v233, %v236
    %v240 = vsub.f32 %v234, %v237
    %v241 = vmul.f32 %v238, %v238
    %v242 = vmul.f32 %v239, %v239
    %v243 = vmul.f32 %v240, %v240
    %v244 = vsel %vm188, %v241, 0.0
    %v245 = vsel %vm189, %v242, 0.0
    %v246 = vsel %vm190, %v243, 0.0
    %v247 = vadd.f32 %v244, %v245
    %v248 = vadd.f32 %v247, %v246
    %v249 = vadd.f32 %v231, %v248
    %250 = vst [vmem:[#allocation17] sm:$0xff] %v249
    %v251 = vld [vmem:[#allocation13] sm:$0xff]
    %v252 = vld [vmem:[#allocation13 + $0x8] sm:$0xff]
    %v253 = vld [vmem:[#allocation13 + $0x10] sm:$0xff]
    %v254 = vand.u32 2147483647, %v251
    %v255 = vand.u32 2147483647, %v252
    %v256 = vand.u32 2147483647, %v253
    %v257 = vsel %vm188, %v254, 0.0
    %v258 = vsel %vm189, %v255, 0.0
    %v259 = vsel %vm190, %v256, 0.0
    %v260 = vld [vmem:[#allocation18] sm:$0xff]
    %v261 = vmax.f32 %v257, %v258
    %v262 = vmax.f32 %v261, %v259
    %v263 = vmax.f32 %v260, %v262
    %264 = vst [vmem:[#allocation18] sm:$0xff] %v263
    // Predicated region
    $region62: #{tpu_custom_call.1} parent=1 // pred_check
      _
    $region63: #{tpu_custom_call.1} parent=1 // pred_check_branch
      %266 = sbr.rel (0) target = $region65
    $region64: #{tpu_custom_call.1} parent=1 // pred_region
      %s268 = ssub.s32 128, 128
      %269 = vsyncadd [#allocation4], %s268
      %s271 = sshll.u32 [#allocation14], 4
      %s272 = int_to_ptr.vmem [resolvable:$true] %s271
      %274 = dma.vmem_to_hbm [thread:$0]  %s272, 128, %s7, [#allocation4]
    $region65: #{tpu_custom_call.1} parent=1 // pred_fallthru
      _
    // Predicated region
    $region66: #{tpu_custom_call.1} parent=1 // pred_check
      _
    $region67: #{tpu_custom_call.1} parent=1 // pred_check_branch
      %276 = sbr.rel (0) target = $region69
    $region68: #{tpu_custom_call.1} parent=1 // pred_region
      %s278 = ssub.s32 128, 128
      %279 = vsyncadd [#allocation16], %s278
      %s281 = sshll.u32 [#allocation15], 4
      %s282 = int_to_ptr.vmem [resolvable:$true] %s281
      %284 = dma.vmem_to_hbm [thread:$0]  %s282, 128, %s8, [#allocation16]
    $region69: #{tpu_custom_call.1} parent=1 // pred_fallthru
      _
    // Predicated region
    $region70: #{tpu_custom_call.1} parent=1 // pred_check
      _
    $region71: #{tpu_custom_call.1} parent=1 // pred_check_branch
      %286 = sbr.rel (0) target = $region73
    $region72: #{tpu_custom_call.1} parent=1 // pred_region
      %s288 = ssub.s32 128, 128
      %289 = vsyncadd [#allocation16], %s288
      %s291 = sshll.u32 [#allocation17], 4
      %s292 = int_to_ptr.vmem [resolvable:$true] %s291
      %294 = dma.vmem_to_hbm [thread:$0]  %s292, 128, %s9, [#allocation16]
    $region73: #{tpu_custom_call.1} parent=1 // pred_fallthru
      _
    // Predicated region
    $region74: #{tpu_custom_call.1} parent=1 // pred_check
      _
    $region75: #{tpu_custom_call.1} parent=1 // pred_check_branch
      %296 = sbr.rel (0) target = $region77
    $region76: #{tpu_custom_call.1} parent=1 // pred_region
      %s298 = ssub.s32 128, 128
      %299 = vsyncadd [#allocation19], %s298
      %s301 = sshll.u32 [#allocation18], 4
      %s302 = int_to_ptr.vmem [resolvable:$true] %s301
      %304 = dma.vmem_to_hbm [thread:$0]  %s302, 128, %s10, [#allocation19]
    $region77: #{tpu_custom_call.1} parent=1 // pred_fallthru
      _
    // Predicated region
    $region78: #{tpu_custom_call.1} parent=1 // pred_check
      _
    $region79: #{tpu_custom_call.1} parent=1 // pred_check_branch
      %306 = sbr.rel (0) target = $region81
    $region80: #{tpu_custom_call.1} parent=1 // pred_region
      %307 = dma.done [#allocation4], 128
    $region81: #{tpu_custom_call.1} parent=1 // pred_fallthru
      _
    // Predicated region
    $region82: #{tpu_custom_call.1} parent=1 // pred_check
      _
    $region83: #{tpu_custom_call.1} parent=1 // pred_check_branch
      %309 = sbr.rel (0) target = $region85
    $region84: #{tpu_custom_call.1} parent=1 // pred_region
      %310 = dma.done [#allocation16], 128
    $region85: #{tpu_custom_call.1} parent=1 // pred_fallthru
      _
    // Predicated region
    $region86: #{tpu_custom_call.1} parent=1 // pred_check
      _
    $region87: #{tpu_custom_call.1} parent=1 // pred_check_branch
      %312 = sbr.rel (0) target = $region89
    $region88: #{tpu_custom_call.1} parent=1 // pred_region
      %313 = dma.done [#allocation16], 128
    $region89: #{tpu_custom_call.1} parent=1 // pred_fallthru
      _
    // Predicated region
    $region90: #{tpu_custom_call.1} parent=1 // pred_check
      _
    $region91: #{tpu_custom_call.1} parent=1 // pred_check_branch
      %315 = sbr.rel (0) target = $region93
    $region92: #{tpu_custom_call.1} parent=1 // pred_region
      %316 = dma.done [#allocation19], 128
    $region93: #{tpu_custom_call.1} parent=1 // pred_fallthru
      _
    %317 = vsyncpa [#allocation3], 1
    %318 = vsyncpa [#allocation6], 1
    %319 = vsyncpa [#allocation9], 1
    %320 = vsyncpa [#allocation12], 1
    %321 = vsyncpa [#allocation4], 1
    %322 = vsyncpa [#allocation16], 1
    %323 = vsyncpa [#allocation19], 1

</llo_original>
